<compile_context>
chip_gen: v5e
topology: v5e:2x2
jax: 0.10.0
libtpu: 0.0.40
codegen_flags: <defaults>
</compile_context>

<pallas_src>
import jax
import jax.numpy as jnp
from jax import lax
from jax.experimental import pallas as pl
from jax.experimental.pallas import tpu as pltpu

_LANES = 128
_Q = 3 * _LANES  # 384: one slab row = 128 interleaved (x,y,z) points


def _score_kernel(d_ref, x_ref, o_ref):
    # d_ref: SMEM f32[3]                 (crop direction)
    # x_ref: VMEM f32[TR, 384]           (128 points / row, channels interleaved)
    # o_ref: VMEM f32[TR, 128]           (lane-dense projection scores)
    #
    # Build the de-interleave + dot weight W[q, j] = d[c] iff q == 3j + c.
    # Rebuilt every step (cheap) so it is megacore-safe under "parallel".
    q = lax.broadcasted_iota(jnp.int32, (_Q, _LANES), 0)
    j3 = lax.broadcasted_iota(jnp.int32, (_Q, _LANES), 1) * 3
    w = (jnp.where(q == j3, d_ref[0], 0.0)
         + jnp.where(q == j3 + 1, d_ref[1], 0.0)
         + jnp.where(q == j3 + 2, d_ref[2], 0.0))
    o_ref[...] = jnp.dot(x_ref[...], w, preferred_element_type=jnp.float32)


def _pick_tile_rows(m_rows, target=1024):
    """One block if the slab fits the budget; otherwise 1024-row tiles
    (= 131072 points, ~1.5 MiB in / 0.5 MiB out per step) so any split is
    real work per v7x core, not per-step overhead on v5e/v6e."""
    if m_rows <= target:
        return m_rows          # full-dim block (no (8,128) divisibility issue)
    return target              # multiple of 8


def _projection_scores(slab, d, *, tile_rows=None):
    """slab: (m_rows, 384) f32 interleaved points, d: (3,) f32 -> (m_rows, 128) f32."""
    m_rows, q = slab.shape
    assert q == _Q
    if tile_rows is None:
        tile_rows = _pick_tile_rows(m_rows)
    grid = (pl.cdiv(m_rows, tile_rows),)
    return pl.pallas_call(
        _score_kernel,
        out_shape=jax.ShapeDtypeStruct((m_rows, _LANES), jnp.float32),
        grid=grid,
        in_specs=[
            pl.BlockSpec(memory_space=pltpu.MemorySpace.SMEM),        # d (3 scalars)
            pl.BlockSpec((tile_rows, _Q), lambda i: (i, 0)),          # point slab
        ],
        out_specs=pl.BlockSpec((tile_rows, _LANES), lambda i: (i, 0)),  # lane-dense scores
        compiler_params=pltpu.CompilerParams(
            dimension_semantics=("parallel",),
            vmem_limit_bytes=32 * 1024 * 1024),
    )(d, slab)


def _scores(xyz, d):
    """Projection scores xyz . d as (B, N) f32, via the Pallas kernel."""
    B, N, _ = xyz.shape
    M = B * N
    m_rows = pl.cdiv(M, _LANES)
    M_pad = m_rows * _LANES
    flat = xyz.astype(jnp.float32).reshape(3 * M)          # free contiguous view
    if M_pad != M:
        # rare unaligned tail: zero-pad (score 0, sliced off before top_k)
        flat = jnp.pad(flat, (0, 3 * (M_pad - M)))
    slab = flat.reshape(m_rows, _Q)                         # free contiguous view
    s = _projection_scores(slab, d.astype(jnp.float32))     # (m_rows, 128)
    return s.reshape(M_pad)[:M].reshape(B, N)


def cropping_forward(xyz, ratio, d):
    """Pallas-backed equivalent of Cropping(ratio).forward(xyz).

    xyz: (B, N, 3) float32
    d:   (3,) float32 unit direction (the module's internal randomness,
         seeded deterministically by the caller)
    returns cropped_xyz: (B, R, 3) with R = int(N * ratio)
    """
    B, N, _ = xyz.shape
    R = int(N * ratio)

    scores = _scores(xyz, d)                                        # (B, N)

    # selection + gather (plain XLA glue; see TODO(synk) at top of file)
    _, idx = jax.lax.top_k(scores, R)                               # (B, R)
    idx = jnp.sort(idx, axis=-1)                                    # keep original order
    cropped_xyz = jnp.take_along_axis(xyz, idx[..., None], axis=1)  # (B, R, 3)
    return cropped_xyz


if __name__ == "__main__":
    key = jax.random.PRNGKey(0)
    kx, kd, kx2 = jax.random.split(key, 3)

    # --- main case: B=2, N=1024 (M=2048 points -> 16-row slab, single block) ---
    B, N = 2, 1024
    ratio = 0.5
    R = int(N * ratio)

    xyz = jax.random.normal(kx, (B, N, 3), dtype=jnp.float32)
    d = jax.random.normal(kd, (3,), dtype=jnp.float32)
    d = d / jnp.linalg.norm(d)

    out = cropping_forward(xyz, ratio, d)
    out = jax.block_until_ready(out)
    assert out.shape == (B, R, 3), out.shape

    # sanity checks against a pure-JAX reference
    scores_ref = jnp.einsum("bnc,c->bn", xyz, d)
    scores_ker = _scores(xyz, d)
    assert jnp.allclose(scores_ker, scores_ref, atol=1e-5, rtol=1e-5)

    _, idx_ref = jax.lax.top_k(scores_ref, R)
    ref = jnp.take_along_axis(xyz, jnp.sort(idx_ref, axis=-1)[..., None], axis=1)
    assert jnp.allclose(out, ref)

    # --- small / non-128-multiple case: N=200 (M=400 -> padded to 512) ---
    B2, N2 = 2, 200
    R2 = int(N2 * ratio)
    xyz2 = jax.random.normal(kx2, (B2, N2, 3), dtype=jnp.float32)
    out2 = jax.block_until_ready(cropping_forward(xyz2, ratio, d))
    assert out2.shape == (B2, R2, 3), out2.shape
    scores2_ref = jnp.einsum("bnc,c->bn", xyz2, d)
    scores2_ker = _scores(xyz2, d)
    assert jnp.allclose(scores2_ker, scores2_ref, atol=1e-5, rtol=1e-5)
    _, idx2_ref = jax.lax.top_k(scores2_ref, R2)
    ref2 = jnp.take_along_axis(xyz2, jnp.sort(idx2_ref, axis=-1)[..., None], axis=1)
    assert jnp.allclose(out2, ref2)

    print("KERNEL_OK")
</pallas_src>

<mosaic_0001>
module attributes {stable_mosaic.version = 11 : i64} {
  func.func @_score_kernel(%arg0: i32, %arg1: memref<3xf32, #tpu.memory_space<smem>>, %arg2: memref<16x384xf32, #tpu.memory_space<vmem>>, %arg3: memref<16x128xf32, #tpu.memory_space<vmem>>) attributes {dimension_semantics = [#tpu.dimension_semantics<parallel>], iteration_bounds = array<i64: 1>, scalar_prefetch = 0 : i64, scratch_operands = 0 : i64, tpu.core_type = #tpu.core_type<tc>, window_params = [{transform_indices = @transform_0, window_bounds = array<i64: 3>}, {transform_indices = @transform_1, window_bounds = array<i64: 16, 384>}, {transform_indices = @transform_2, window_bounds = array<i64: 16, 128>}]} {
    %0 = tpu.iota {dimensions = array<i32: 0>} : vector<384x128xi32>
    %1 = tpu.iota {dimensions = array<i32: 1>} : vector<384x128xi32>
    %c3_i32 = arith.constant 3 : i32
    %2 = vector.broadcast %c3_i32 : i32 to vector<384x128xi32>
    %3 = arith.muli %1, %2 : vector<384x128xi32>
    %4 = arith.cmpi eq, %0, %3 : vector<384x128xi32>
    %c0 = arith.constant 0 : index
    %5 = memref.load %arg1[%c0] : memref<3xf32, #tpu.memory_space<smem>>
    %cst = arith.constant 0.000000e+00 : f32
    %6 = vector.broadcast %5 : f32 to vector<384x128xf32>
    %7 = vector.broadcast %cst : f32 to vector<384x128xf32>
    %8 = arith.select %4, %6, %7 : vector<384x128xi1>, vector<384x128xf32>
    %c1_i32 = arith.constant 1 : i32
    %9 = vector.broadcast %c1_i32 : i32 to vector<384x128xi32>
    %10 = arith.addi %3, %9 : vector<384x128xi32>
    %11 = arith.cmpi eq, %0, %10 : vector<384x128xi32>
    %c1 = arith.constant 1 : index
    %12 = memref.load %arg1[%c1] : memref<3xf32, #tpu.memory_space<smem>>
    %cst_0 = arith.constant 0.000000e+00 : f32
    %13 = vector.broadcast %12 : f32 to vector<384x128xf32>
    %14 = vector.broadcast %cst_0 : f32 to vector<384x128xf32>
    %15 = arith.select %11, %13, %14 : vector<384x128xi1>, vector<384x128xf32>
    %16 = arith.addf %8, %15 : vector<384x128xf32>
    %c2_i32 = arith.constant 2 : i32
    %17 = vector.broadcast %c2_i32 : i32 to vector<384x128xi32>
    %18 = arith.addi %3, %17 : vector<384x128xi32>
    %19 = arith.cmpi eq, %0, %18 : vector<384x128xi32>
    %c2 = arith.constant 2 : index
    %20 = memref.load %arg1[%c2] : memref<3xf32, #tpu.memory_space<smem>>
    %cst_1 = arith.constant 0.000000e+00 : f32
    %21 = vector.broadcast %20 : f32 to vector<384x128xf32>
    %22 = vector.broadcast %cst_1 : f32 to vector<384x128xf32>
    %23 = arith.select %19, %21, %22 : vector<384x128xi1>, vector<384x128xf32>
    %24 = arith.addf %16, %23 : vector<384x128xf32>
    %c0_2 = arith.constant 0 : index
    %c0_3 = arith.constant 0 : index
    %25 = vector.load %arg2[%c0_2, %c0_3] : memref<16x384xf32, #tpu.memory_space<vmem>>, vector<16x384xf32>
    %cst_4 = arith.constant dense<0.000000e+00> : vector<16x128xf32>
    %26 = tpu.matmul %25, %24, %cst_4 {dimension_numbers = #tpu.dot_dimension_numbers<[1], [0], [0], [1], [0, 0, 1, 1], [], []>} : vector<16x384xf32>, vector<384x128xf32>, vector<16x128xf32> -> vector<16x128xf32>
    %c0_5 = arith.constant 0 : index
    %c0_6 = arith.constant 0 : index
    %27 = vector.load %arg3[%c0_5, %c0_6] : memref<16x128xf32, #tpu.memory_space<vmem>>, vector<16x128xf32>
    tpu.vector_store %arg3[%c0_5, %c0_6], %26 {strides = array<i32>} : memref<16x128xf32, #tpu.memory_space<vmem>>, vector<16x128xf32>,
    return
  }
  func.func @transform_0(%arg0: i32) -> i32 {
    %c0_i32 = arith.constant 0 : i32
    %c0_i32_0 = arith.constant 0 : i32
    return %c0_i32 : i32
  }
  func.func @transform_1(%arg0: i32) -> (i32, i32) {
    %c0_i32 = arith.constant 0 : i32
    %c0_i32_0 = arith.constant 0 : i32
    return %arg0, %c0_i32 : i32, i32
  }
  func.func @transform_2(%arg0: i32) -> (i32, i32) {
    %c0_i32 = arith.constant 0 : i32
    %c0_i32_0 = arith.constant 0 : i32
    return %arg0, %c0_i32 : i32, i32
  }
}

</mosaic_0001>

<llo_original>
// kernel: tpu_custom_call.1
$region0: #{tpu_custom_call.1}
  #allocation0 [shape = 'u32[]', space=smem, size = 0x4, offset = 0x4, fixed_abs, tag = 'smem constant byte address 0x4 - core index']
  #allocation1 [shape = 'u32[72,128]{1,0:T(1,128)}', space=vmem, size = 0x9000, scoped, tag = 'internal scratch']
  %s0 = inlined_call_operand.hbm [shape: f32[3], index: 0, kind: input, shape index: {}]
  %s1 = inlined_call_operand.hbm [shape: f32[16,384], index: 1, kind: input, shape index: {}]
  %s2 = inlined_call_operand.hbm [shape: f32[16,128], index: 2, kind: output, shape index: {}]
  %s3 = sld [smem:[#allocation0]]
  $region26: #{tpu_custom_call.1} parent=0
    _
  %s5 = ssub.s32 1, %s3
  %s6 = scalar_select 0, %s5, %s3
  $region1: #{tpu_custom_call.1} parent=0
    #allocation2 [shape = 'u8[512]{0}', space=smem, size = 0x200, scoped, tag = 'input window, operand 0, single buffered']
    #allocation3 [shape = 's32[1]{0}', space=sflag, size = 0x4, scoped, tag = 'scoped memory for tpu_custom_call.1']
    #allocation4 [shape = 's32[1]{0}', space=sflag, size = 0x4, scoped, tag = 'scoped memory for tpu_custom_call.1']
    #allocation5 [shape = 's32[1]{0}', space=sflag, size = 0x4, scoped, tag = 'scoped memory for tpu_custom_call.1']
    #allocation6 [shape = 'u8[24576]{0}', space=vmem, size = 0x6000, scoped, tag = 'input window, operand 1, single buffered']
    #allocation7 [shape = 'u8[8192]{0}', space=vmem, size = 0x2000, scoped, tag = 'output window, operand 0, single buffered']
    %7 = vsyncpa [#allocation5], 0
    %8 = vsyncpa [#allocation3], 0
    %9 = vsyncpa [#allocation4], 0
    // Predicated region
    $region2: #{tpu_custom_call.1} parent=1 // pred_check
      _
    $region3: #{tpu_custom_call.1} parent=1 // pred_check_branch
      %11 = sbr.rel (0) target = $region5
    $region4: #{tpu_custom_call.1} parent=1 // pred_region
      %13 = vsyncadd [#allocation5], 0
      %s15 = sshll.u32 %s0, 4
      %s16 = int_to_ptr.hbm [resolvable:$true] %s15
      %18 = dma.hbm_to_smem %s16, 16, [#allocation2], [#allocation5]
    $region5: #{tpu_custom_call.1} parent=1 // pred_fallthru
      _
    // Predicated region
    $region6: #{tpu_custom_call.1} parent=1 // pred_check
      _
    $region7: #{tpu_custom_call.1} parent=1 // pred_check_branch
      %20 = sbr.rel (0) target = $region9
    $region8: #{tpu_custom_call.1} parent=1 // pred_region
      %22 = vsyncadd [#allocation3], 0
      %s23 = sshll.u32 %s1, 4
      %s24 = int_to_ptr.hbm [resolvable:$true] %s23
      %s25 = sshll.u32 [#allocation6], 4
      %s26 = int_to_ptr.vmem [resolvable:$true] %s25
      %31 = dma.hbm_to_vmem [thread:$0]  %s24, 768, %s26, [#allocation3], 384, 384, 24
    $region9: #{tpu_custom_call.1} parent=1 // pred_fallthru
      _
    // Predicated region
    $region10: #{tpu_custom_call.1} parent=1 // pred_check
      _
    $region11: #{tpu_custom_call.1} parent=1 // pred_check_branch
      %33 = sbr.rel (0) target = $region13
    $region12: #{tpu_custom_call.1} parent=1 // pred_region
      %35 = dma.done [#allocation5], 16
    $region13: #{tpu_custom_call.1} parent=1 // pred_fallthru
      _
    // Predicated region
    $region14: #{tpu_custom_call.1} parent=1 // pred_check
      _
    $region15: #{tpu_custom_call.1} parent=1 // pred_check_branch
      %37 = sbr.rel (0) target = $region17
    $region16: #{tpu_custom_call.1} parent=1 // pred_region
      %39 = dma.done [#allocation3], 768
    $region17: #{tpu_custom_call.1} parent=1 // pred_fallthru
      _
    %40 = sfence
    %v41 = vlaneseq
    %v42 = vshrl.u32 %v41, 7
    %v43 = vadd.s32 %v42, 8
    %v44 = vadd.s32 %v42, 16
    %v45 = vadd.s32 %v42, 24
    %v46 = vadd.s32 %v42, 32
    %v47 = vadd.s32 %v42, 40
    %v48 = vadd.s32 %v42, 48
    %v49 = vadd.s32 %v42, 56
    %v50 = vadd.s32 %v42, 64
    %v51 = vadd.s32 %v42, 72
    %v52 = vadd.s32 %v42, 80
    %v53 = vadd.s32 %v42, 88
    %v54 = vadd.s32 %v42, 96
    %v55 = vadd.s32 %v42, 104
    %v56 = vadd.s32 %v42, 112
    %v57 = vadd.s32 %v42, 120
    %v58 = vadd.s32 %v42, 128
    %v59 = vadd.s32 %v42, 136
    %v60 = vadd.s32 %v42, 144
    %v61 = vadd.s32 %v42, 152
    %v62 = vadd.s32 %v42, 160
    %v63 = vadd.s32 %v42, 168
    %v64 = vadd.s32 %v42, 176
    %v65 = vadd.s32 %v42, 184
    %v66 = vadd.s32 %v42, 192
    %v67 = vadd.s32 %v42, 200
    %v68 = vadd.s32 %v42, 208
    %v69 = vadd.s32 %v42, 216
    %v70 = vadd.s32 %v42, 224
    %v71 = vadd.s32 %v42, 232
    %v72 = vadd.s32 %v42, 240
    %v73 = vadd.s32 %v42, 248
    %v74 = vadd.s32 %v42, 256
    %v75 = vadd.s32 %v42, 264
    %v76 = vadd.s32 %v42, 272
    %v77 = vadd.s32 %v42, 280
    %v78 = vadd.s32 %v42, 288
    %v79 = vadd.s32 %v42, 296
    %v80 = vadd.s32 %v42, 304
    %v81 = vadd.s32 %v42, 312
    %v82 = vadd.s32 %v42, 320
    %v83 = vadd.s32 %v42, 328
    %v84 = vadd.s32 %v42, 336
    %v85 = vadd.s32 %v42, 344
    %v86 = vadd.s32 %v42, 352
    %v87 = vadd.s32 %v42, 360
    %v88 = vadd.s32 %v42, 368
    %v89 = vadd.s32 %v42, 376
    %v90 = vlaneseq
    %v91 = vand.u32 %v90, 127
    %v92 = vmul.u32 %v91, 3
    %vm93 = vcmp.eq.s32.totalorder %v42, %v92
    %vm94 = vcmp.eq.s32.totalorder %v43, %v92
    %vm95 = vcmp.eq.s32.totalorder %v44, %v92
    %vm96 = vcmp.eq.s32.totalorder %v45, %v92
    %vm97 = vcmp.eq.s32.totalorder %v46, %v92
    %vm98 = vcmp.eq.s32.totalorder %v47, %v92
    %vm99 = vcmp.eq.s32.totalorder %v48, %v92
    %vm100 = vcmp.eq.s32.totalorder %v49, %v92
    %vm101 = vcmp.eq.s32.totalorder %v50, %v92
    %vm102 = vcmp.eq.s32.totalorder %v51, %v92
    %vm103 = vcmp.eq.s32.totalorder %v52, %v92
    %vm104 = vcmp.eq.s32.totalorder %v53, %v92
    %vm105 = vcmp.eq.s32.totalorder %v54, %v92
    %vm106 = vcmp.eq.s32.totalorder %v55, %v92
    %vm107 = vcmp.eq.s32.totalorder %v56, %v92
    %vm108 = vcmp.eq.s32.totalorder %v57, %v92
    %vm109 = vcmp.eq.s32.totalorder %v58, %v92
    %vm110 = vcmp.eq.s32.totalorder %v59, %v92
    %vm111 = vcmp.eq.s32.totalorder %v60, %v92
    %vm112 = vcmp.eq.s32.totalorder %v61, %v92
    %vm113 = vcmp.eq.s32.totalorder %v62, %v92
    %vm114 = vcmp.eq.s32.totalorder %v63, %v92
    %vm115 = vcmp.eq.s32.totalorder %v64, %v92
    %vm116 = vcmp.eq.s32.totalorder %v65, %v92
    %vm117 = vcmp.eq.s32.totalorder %v66, %v92
    %vm118 = vcmp.eq.s32.totalorder %v67, %v92
    %vm119 = vcmp.eq.s32.totalorder %v68, %v92
    %vm120 = vcmp.eq.s32.totalorder %v69, %v92
    %vm121 = vcmp.eq.s32.totalorder %v70, %v92
    %vm122 = vcmp.eq.s32.totalorder %v71, %v92
    %vm123 = vcmp.eq.s32.totalorder %v72, %v92
    %vm124 = vcmp.eq.s32.totalorder %v73, %v92
    %vm125 = vcmp.eq.s32.totalorder %v74, %v92
    %vm126 = vcmp.eq.s32.totalorder %v75, %v92
    %vm127 = vcmp.eq.s32.totalorder %v76, %v92
    %vm128 = vcmp.eq.s32.totalorder %v77, %v92
    %vm129 = vcmp.eq.s32.totalorder %v78, %v92
    %vm130 = vcmp.eq.s32.totalorder %v79, %v92
    %vm131 = vcmp.eq.s32.totalorder %v80, %v92
    %vm132 = vcmp.eq.s32.totalorder %v81, %v92
    %vm133 = vcmp.eq.s32.totalorder %v82, %v92
    %vm134 = vcmp.eq.s32.totalorder %v83, %v92
    %vm135 = vcmp.eq.s32.totalorder %v84, %v92
    %vm136 = vcmp.eq.s32.totalorder %v85, %v92
    %vm137 = vcmp.eq.s32.totalorder %v86, %v92
    %vm138 = vcmp.eq.s32.totalorder %v87, %v92
    %vm139 = vcmp.eq.s32.totalorder %v88, %v92
    %vm140 = vcmp.eq.s32.totalorder %v89, %v92
    %s141 = sld [smem:[#allocation2]]
    %v142 = vstv %s141
    %v143 = vsel %vm93, %v142, 0.0
    %v144 = vsel %vm94, %v142, 0.0
    %v145 = vsel %vm95, %v142, 0.0
    %v146 = vsel %vm96, %v142, 0.0
    %v147 = vsel %vm97, %v142, 0.0
    %v148 = vsel %vm98, %v142, 0.0
    %v149 = vsel %vm99, %v142, 0.0
    %v150 = vsel %vm100, %v142, 0.0
    %v151 = vsel %vm101, %v142, 0.0
    %v152 = vsel %vm102, %v142, 0.0
    %v153 = vsel %vm103, %v142, 0.0
    %v154 = vsel %vm104, %v142, 0.0
    %v155 = vsel %vm105, %v142, 0.0
    %v156 = vsel %vm106, %v142, 0.0
    %v157 = vsel %vm107, %v142, 0.0
    %v158 = vsel %vm108, %v142, 0.0
    %v159 = vsel %vm109, %v142, 0.0
    %v160 = vsel %vm110, %v142, 0.0
    %v161 = vsel %vm111, %v142, 0.0
    %v162 = vsel %vm112, %v142, 0.0
    %v163 = vsel %vm113, %v142, 0.0
    %v164 = vsel %vm114, %v142, 0.0
    %v165 = vsel %vm115, %v142, 0.0
    %v166 = vsel %vm116, %v142, 0.0
    %v167 = vsel %vm117, %v142, 0.0
    %v168 = vsel %vm118, %v142, 0.0
    %v169 = vsel %vm119, %v142, 0.0
    %v170 = vsel %vm120, %v142, 0.0
    %v171 = vsel %vm121, %v142, 0.0
    %v172 = vsel %vm122, %v142, 0.0
    %v173 = vsel %vm123, %v142, 0.0
    %v174 = vsel %vm124, %v142, 0.0
    %v175 = vsel %vm125, %v142, 0.0
    %v176 = vsel %vm126, %v142, 0.0
    %v177 = vsel %vm127, %v142, 0.0
    %v178 = vsel %vm128, %v142, 0.0
    %v179 = vsel %vm129, %v142, 0.0
    %v180 = vsel %vm130, %v142, 0.0
    %v181 = vsel %vm131, %v142, 0.0
    %v182 = vsel %vm132, %v142, 0.0
    %v183 = vsel %vm133, %v142, 0.0
    %v184 = vsel %vm134, %v142, 0.0
    %v185 = vsel %vm135, %v142, 0.0
    %v186 = vsel %vm136, %v142, 0.0
    %v187 = vsel %vm137, %v142, 0.0
    %v188 = vsel %vm138, %v142, 0.0
    %v189 = vsel %vm139, %v142, 0.0
    %v190 = vsel %vm140, %v142, 0.0
    %v191 = vadd.s32 %v92, 1
    %vm192 = vcmp.eq.s32.totalorder %v42, %v191
    %vm193 = vcmp.eq.s32.totalorder %v43, %v191
    %vm194 = vcmp.eq.s32.totalorder %v44, %v191
    %vm195 = vcmp.eq.s32.totalorder %v45, %v191
    %vm196 = vcmp.eq.s32.totalorder %v46, %v191
    %vm197 = vcmp.eq.s32.totalorder %v47, %v191
    %vm198 = vcmp.eq.s32.totalorder %v48, %v191
    %vm199 = vcmp.eq.s32.totalorder %v49, %v191
    %vm200 = vcmp.eq.s32.totalorder %v50, %v191
    %vm201 = vcmp.eq.s32.totalorder %v51, %v191
    %vm202 = vcmp.eq.s32.totalorder %v52, %v191
    %vm203 = vcmp.eq.s32.totalorder %v53, %v191
    %vm204 = vcmp.eq.s32.totalorder %v54, %v191
    %vm205 = vcmp.eq.s32.totalorder %v55, %v191
    %vm206 = vcmp.eq.s32.totalorder %v56, %v191
    %vm207 = vcmp.eq.s32.totalorder %v57, %v191
    %vm208 = vcmp.eq.s32.totalorder %v58, %v191
    %vm209 = vcmp.eq.s32.totalorder %v59, %v191
    %vm210 = vcmp.eq.s32.totalorder %v60, %v191
    %vm211 = vcmp.eq.s32.totalorder %v61, %v191
    %vm212 = vcmp.eq.s32.totalorder %v62, %v191
    %vm213 = vcmp.eq.s32.totalorder %v63, %v191
    %vm214 = vcmp.eq.s32.totalorder %v64, %v191
    %vm215 = vcmp.eq.s32.totalorder %v65, %v191
    %vm216 = vcmp.eq.s32.totalorder %v66, %v191
    %vm217 = vcmp.eq.s32.totalorder %v67, %v191
    %vm218 = vcmp.eq.s32.totalorder %v68, %v191
    %vm219 = vcmp.eq.s32.totalorder %v69, %v191
    %vm220 = vcmp.eq.s32.totalorder %v70, %v191
    %vm221 = vcmp.eq.s32.totalorder %v71, %v191
    %vm222 = vcmp.eq.s32.totalorder %v72, %v191
    %vm223 = vcmp.eq.s32.totalorder %v73, %v191
    %vm224 = vcmp.eq.s32.totalorder %v74, %v191
    %vm225 = vcmp.eq.s32.totalorder %v75, %v191
    %vm226 = vcmp.eq.s32.totalorder %v76, %v191
    %vm227 = vcmp.eq.s32.totalorder %v77, %v191
    %vm228 = vcmp.eq.s32.totalorder %v78, %v191
    %vm229 = vcmp.eq.s32.totalorder %v79, %v191
    %vm230 = vcmp.eq.s32.totalorder %v80, %v191
    %vm231 = vcmp.eq.s32.totalorder %v81, %v191
    %vm232 = vcmp.eq.s32.totalorder %v82, %v191
    %vm233 = vcmp.eq.s32.totalorder %v83, %v191
    %vm234 = vcmp.eq.s32.totalorder %v84, %v191
    %vm235 = vcmp.eq.s32.totalorder %v85, %v191
    %vm236 = vcmp.eq.s32.totalorder %v86, %v191
    %vm237 = vcmp.eq.s32.totalorder %v87, %v191
    %vm238 = vcmp.eq.s32.totalorder %v88, %v191
    %vm239 = vcmp.eq.s32.totalorder %v89, %v191
    %s240 = sld [smem:[#allocation2 + $0x1]]
    %v241 = vstv %s240
    %v242 = vsel %vm192, %v241, 0.0
    %v243 = vsel %vm193, %v241, 0.0
    %v244 = vsel %vm194, %v241, 0.0
    %v245 = vsel %vm195, %v241, 0.0
    %v246 = vsel %vm196, %v241, 0.0
    %v247 = vsel %vm197, %v241, 0.0
    %v248 = vsel %vm198, %v241, 0.0
    %v249 = vsel %vm199, %v241, 0.0
    %v250 = vsel %vm200, %v241, 0.0
    %v251 = vsel %vm201, %v241, 0.0
    %v252 = vsel %vm202, %v241, 0.0
    %v253 = vsel %vm203, %v241, 0.0
    %v254 = vsel %vm204, %v241, 0.0
    %v255 = vsel %vm205, %v241, 0.0
    %v256 = vsel %vm206, %v241, 0.0
    %v257 = vsel %vm207, %v241, 0.0
    %v258 = vsel %vm208, %v241, 0.0
    %v259 = vsel %vm209, %v241, 0.0
    %v260 = vsel %vm210, %v241, 0.0
    %v261 = vsel %vm211, %v241, 0.0
    %v262 = vsel %vm212, %v241, 0.0
    %v263 = vsel %vm213, %v241, 0.0
    %v264 = vsel %vm214, %v241, 0.0
    %v265 = vsel %vm215, %v241, 0.0
    %v266 = vsel %vm216, %v241, 0.0
    %v267 = vsel %vm217, %v241, 0.0
    %v268 = vsel %vm218, %v241, 0.0
    %v269 = vsel %vm219, %v241, 0.0
    %v270 = vsel %vm220, %v241, 0.0
    %v271 = vsel %vm221, %v241, 0.0
    %v272 = vsel %vm222, %v241, 0.0
    %v273 = vsel %vm223, %v241, 0.0
    %v274 = vsel %vm224, %v241, 0.0
    %v275 = vsel %vm225, %v241, 0.0
    %v276 = vsel %vm226, %v241, 0.0
    %v277 = vsel %vm227, %v241, 0.0
    %v278 = vsel %vm228, %v241, 0.0
    %v279 = vsel %vm229, %v241, 0.0
    %v280 = vsel %vm230, %v241, 0.0
    %v281 = vsel %vm231, %v241, 0.0
    %v282 = vsel %vm232, %v241, 0.0
    %v283 = vsel %vm233, %v241, 0.0
    %v284 = vsel %vm234, %v241, 0.0
    %v285 = vsel %vm235, %v241, 0.0
    %v286 = vsel %vm236, %v241, 0.0
    %v287 = vsel %vm237, %v241, 0.0
    %v288 = vsel %vm238, %v241, 0.0
    %v289 = vsel %vm239, %v241, 0.0
    %v290 = vadd.f32 %v143, %v242
    %v291 = vadd.f32 %v144, %v243
    %v292 = vadd.f32 %v145, %v244
    %v293 = vadd.f32 %v146, %v245
    %v294 = vadd.f32 %v147, %v246
    %v295 = vadd.f32 %v148, %v247
    %v296 = vadd.f32 %v149, %v248
    %v297 = vadd.f32 %v150, %v249
    %v298 = vadd.f32 %v151, %v250
    %v299 = vadd.f32 %v152, %v251
    %v300 = vadd.f32 %v153, %v252
    %v301 = vadd.f32 %v154, %v253
    %v302 = vadd.f32 %v155, %v254
    %v303 = vadd.f32 %v156, %v255
    %v304 = vadd.f32 %v157, %v256
    %v305 = vadd.f32 %v158, %v257
    %v306 = vadd.f32 %v159, %v258
    %v307 = vadd.f32 %v160, %v259
    %v308 = vadd.f32 %v161, %v260
    %v309 = vadd.f32 %v162, %v261
    %v310 = vadd.f32 %v163, %v262
    %v311 = vadd.f32 %v164, %v263
    %v312 = vadd.f32 %v165, %v264
    %v313 = vadd.f32 %v166, %v265
    %v314 = vadd.f32 %v167, %v266
    %v315 = vadd.f32 %v168, %v267
    %v316 = vadd.f32 %v169, %v268
    %v317 = vadd.f32 %v170, %v269
    %v318 = vadd.f32 %v171, %v270
    %v319 = vadd.f32 %v172, %v271
    %v320 = vadd.f32 %v173, %v272
    %v321 = vadd.f32 %v174, %v273
    %v322 = vadd.f32 %v175, %v274
    %v323 = vadd.f32 %v176, %v275
    %v324 = vadd.f32 %v177, %v276
    %v325 = vadd.f32 %v178, %v277
    %v326 = vadd.f32 %v179, %v278
    %v327 = vadd.f32 %v180, %v279
    %v328 = vadd.f32 %v181, %v280
    %v329 = vadd.f32 %v182, %v281
    %v330 = vadd.f32 %v183, %v282
    %v331 = vadd.f32 %v184, %v283
    %v332 = vadd.f32 %v185, %v284
    %v333 = vadd.f32 %v186, %v285
    %v334 = vadd.f32 %v187, %v286
    %v335 = vadd.f32 %v188, %v287
    %v336 = vadd.f32 %v189, %v288
    %v337 = vadd.f32 %v190, %v289
    %v338 = vadd.s32 %v92, 2
    %vm339 = vcmp.eq.s32.totalorder %v42, %v338
    %vm340 = vcmp.eq.s32.totalorder %v43, %v338
    %vm341 = vcmp.eq.s32.totalorder %v44, %v338
    %vm342 = vcmp.eq.s32.totalorder %v45, %v338
    %vm343 = vcmp.eq.s32.totalorder %v46, %v338
    %vm344 = vcmp.eq.s32.totalorder %v47, %v338
    %vm345 = vcmp.eq.s32.totalorder %v48, %v338
    %vm346 = vcmp.eq.s32.totalorder %v49, %v338
    %vm347 = vcmp.eq.s32.totalorder %v50, %v338
    %vm348 = vcmp.eq.s32.totalorder %v51, %v338
    %vm349 = vcmp.eq.s32.totalorder %v52, %v338
    %vm350 = vcmp.eq.s32.totalorder %v53, %v338
    %vm351 = vcmp.eq.s32.totalorder %v54, %v338
    %vm352 = vcmp.eq.s32.totalorder %v55, %v338
    %vm353 = vcmp.eq.s32.totalorder %v56, %v338
    %vm354 = vcmp.eq.s32.totalorder %v57, %v338
    %vm355 = vcmp.eq.s32.totalorder %v58, %v338
    %vm356 = vcmp.eq.s32.totalorder %v59, %v338
    %vm357 = vcmp.eq.s32.totalorder %v60, %v338
    %vm358 = vcmp.eq.s32.totalorder %v61, %v338
    %vm359 = vcmp.eq.s32.totalorder %v62, %v338
    %vm360 = vcmp.eq.s32.totalorder %v63, %v338
    %vm361 = vcmp.eq.s32.totalorder %v64, %v338
    %vm362 = vcmp.eq.s32.totalorder %v65, %v338
    %vm363 = vcmp.eq.s32.totalorder %v66, %v338
    %vm364 = vcmp.eq.s32.totalorder %v67, %v338
    %vm365 = vcmp.eq.s32.totalorder %v68, %v338
    %vm366 = vcmp.eq.s32.totalorder %v69, %v338
    %vm367 = vcmp.eq.s32.totalorder %v70, %v338
    %vm368 = vcmp.eq.s32.totalorder %v71, %v338
    %vm369 = vcmp.eq.s32.totalorder %v72, %v338
    %vm370 = vcmp.eq.s32.totalorder %v73, %v338
    %vm371 = vcmp.eq.s32.totalorder %v74, %v338
    %vm372 = vcmp.eq.s32.totalorder %v75, %v338
    %vm373 = vcmp.eq.s32.totalorder %v76, %v338
    %vm374 = vcmp.eq.s32.totalorder %v77, %v338
    %vm375 = vcmp.eq.s32.totalorder %v78, %v338
    %vm376 = vcmp.eq.s32.totalorder %v79, %v338
    %vm377 = vcmp.eq.s32.totalorder %v80, %v338
    %vm378 = vcmp.eq.s32.totalorder %v81, %v338
    %vm379 = vcmp.eq.s32.totalorder %v82, %v338
    %vm380 = vcmp.eq.s32.totalorder %v83, %v338
    %vm381 = vcmp.eq.s32.totalorder %v84, %v338
    %vm382 = vcmp.eq.s32.totalorder %v85, %v338
    %vm383 = vcmp.eq.s32.totalorder %v86, %v338
    %vm384 = vcmp.eq.s32.totalorder %v87, %v338
    %vm385 = vcmp.eq.s32.totalorder %v88, %v338
    %vm386 = vcmp.eq.s32.totalorder %v89, %v338
    %s387 = sld [smem:[#allocation2 + $0x2]]
    %v388 = vstv %s387
    %v389 = vsel %vm339, %v388, 0.0
    %v390 = vsel %vm340, %v388, 0.0
    %v391 = vsel %vm341, %v388, 0.0
    %v392 = vsel %vm342, %v388, 0.0
    %v393 = vsel %vm343, %v388, 0.0
    %v394 = vsel %vm344, %v388, 0.0
    %v395 = vsel %vm345, %v388, 0.0
    %v396 = vsel %vm346, %v388, 0.0
    %v397 = vsel %vm347, %v388, 0.0
    %v398 = vsel %vm348, %v388, 0.0
    %v399 = vsel %vm349, %v388, 0.0
    %v400 = vsel %vm350, %v388, 0.0
    %v401 = vsel %vm351, %v388, 0.0
    %v402 = vsel %vm352, %v388, 0.0
    %v403 = vsel %vm353, %v388, 0.0
    %v404 = vsel %vm354, %v388, 0.0
    %v405 = vsel %vm355, %v388, 0.0
    %v406 = vsel %vm356, %v388, 0.0
    %v407 = vsel %vm357, %v388, 0.0
    %v408 = vsel %vm358, %v388, 0.0
    %v409 = vsel %vm359, %v388, 0.0
    %v410 = vsel %vm360, %v388, 0.0
    %v411 = vsel %vm361, %v388, 0.0
    %v412 = vsel %vm362, %v388, 0.0
    %v413 = vsel %vm363, %v388, 0.0
    %v414 = vsel %vm364, %v388, 0.0
    %v415 = vsel %vm365, %v388, 0.0
    %v416 = vsel %vm366, %v388, 0.0
    %v417 = vsel %vm367, %v388, 0.0
    %v418 = vsel %vm368, %v388, 0.0
    %v419 = vsel %vm369, %v388, 0.0
    %v420 = vsel %vm370, %v388, 0.0
    %v421 = vsel %vm371, %v388, 0.0
    %v422 = vsel %vm372, %v388, 0.0
    %v423 = vsel %vm373, %v388, 0.0
    %v424 = vsel %vm374, %v388, 0.0
    %v425 = vsel %vm375, %v388, 0.0
    %v426 = vsel %vm376, %v388, 0.0
    %v427 = vsel %vm377, %v388, 0.0
    %v428 = vsel %vm378, %v388, 0.0
    %v429 = vsel %vm379, %v388, 0.0
    %v430 = vsel %vm380, %v388, 0.0
    %v431 = vsel %vm381, %v388, 0.0
    %v432 = vsel %vm382, %v388, 0.0
    %v433 = vsel %vm383, %v388, 0.0
    %v434 = vsel %vm384, %v388, 0.0
    %v435 = vsel %vm385, %v388, 0.0
    %v436 = vsel %vm386, %v388, 0.0
    %v437 = vadd.f32 %v290, %v389
    %v438 = vadd.f32 %v291, %v390
    %v439 = vadd.f32 %v292, %v391
    %v440 = vadd.f32 %v293, %v392
    %v441 = vadd.f32 %v294, %v393
    %v442 = vadd.f32 %v295, %v394
    %v443 = vadd.f32 %v296, %v395
    %v444 = vadd.f32 %v297, %v396
    %v445 = vadd.f32 %v298, %v397
    %v446 = vadd.f32 %v299, %v398
    %v447 = vadd.f32 %v300, %v399
    %v448 = vadd.f32 %v301, %v400
    %v449 = vadd.f32 %v302, %v401
    %v450 = vadd.f32 %v303, %v402
    %v451 = vadd.f32 %v304, %v403
    %v452 = vadd.f32 %v305, %v404
    %v453 = vadd.f32 %v306, %v405
    %v454 = vadd.f32 %v307, %v406
    %v455 = vadd.f32 %v308, %v407
    %v456 = vadd.f32 %v309, %v408
    %v457 = vadd.f32 %v310, %v409
    %v458 = vadd.f32 %v311, %v410
    %v459 = vadd.f32 %v312, %v411
    %v460 = vadd.f32 %v313, %v412
    %v461 = vadd.f32 %v314, %v413
    %v462 = vadd.f32 %v315, %v414
    %v463 = vadd.f32 %v316, %v415
    %v464 = vadd.f32 %v317, %v416
    %v465 = vadd.f32 %v318, %v417
    %v466 = vadd.f32 %v319, %v418
    %v467 = vadd.f32 %v320, %v419
    %v468 = vadd.f32 %v321, %v420
    %v469 = vadd.f32 %v322, %v421
    %v470 = vadd.f32 %v323, %v422
    %v471 = vadd.f32 %v324, %v423
    %v472 = vadd.f32 %v325, %v424
    %v473 = vadd.f32 %v326, %v425
    %v474 = vadd.f32 %v327, %v426
    %v475 = vadd.f32 %v328, %v427
    %v476 = vadd.f32 %v329, %v428
    %v477 = vadd.f32 %v330, %v429
    %v478 = vadd.f32 %v331, %v430
    %v479 = vadd.f32 %v332, %v431
    %v480 = vadd.f32 %v333, %v432
    %v481 = vadd.f32 %v334, %v433
    %v482 = vadd.f32 %v335, %v434
    %v483 = vadd.f32 %v336, %v435
    %v484 = vadd.f32 %v337, %v436
    %v485 = vld [vmem:[#allocation6] sm:$0xff]
    %v486 = vld [vmem:[#allocation6 + $0x8] sm:$0xff]
    %v487 = vld [vmem:[#allocation6 + $0x10] sm:$0xff]
    %v488 = vld [vmem:[#allocation6 + $0x18] sm:$0xff]
    %v489 = vld [vmem:[#allocation6 + $0x20] sm:$0xff]
    %v490 = vld [vmem:[#allocation6 + $0x28] sm:$0xff]
    %491 = vmatpush.msra.mxu0 %v452
    %492 = vmatpush.msra.mxu0 %v451
    %493 = vmatpush.msra.mxu0 %v450
    %494 = vmatpush.msra.mxu0 %v449
    %495 = vmatpush.msra.mxu0 %v448
    %496 = vmatpush.msra.mxu0 %v447
    %497 = vmatpush.msra.mxu0 %v446
    %498 = vmatpush.msra.mxu0 %v445
    %499 = vmatpush.msra.mxu0 %v444
    %500 = vmatpush.msra.mxu0 %v443
    %501 = vmatpush.msra.mxu0 %v442
    %502 = vmatpush.msra.mxu0 %v441
    %503 = vmatpush.msra.mxu0 %v440
    %504 = vmatpush.msra.mxu0 %v439
    %505 = vmatpush.msra.mxu0 %v438
    %506 = vmatpush.msra.mxu0 %v437
    %507 = vmatmul.f32.gmra.mxu0 %v485
    %v508 = vpop.f32.mrf.mxu0
    %v509 = vadd.f32 0.0, %v508
    %510 = vmatmul.f32.gmra.mxu0 %v488
    %v511 = vpop.f32.mrf.mxu0
    %v512 = vadd.f32 0.0, %v511
    %513 = vdwg.mxu0
    %514 = vmatpush.msra.mxu0 %v468
    %515 = vmatpush.msra.mxu0 %v467
    %516 = vmatpush.msra.mxu0 %v466
    %517 = vmatpush.msra.mxu0 %v465
    %518 = vmatpush.msra.mxu0 %v464
    %519 = vmatpush.msra.mxu0 %v463
    %520 = vmatpush.msra.mxu0 %v462
    %521 = vmatpush.msra.mxu0 %v461
    %522 = vmatpush.msra.mxu0 %v460
    %523 = vmatpush.msra.mxu0 %v459
    %524 = vmatpush.msra.mxu0 %v458
    %525 = vmatpush.msra.mxu0 %v457
    %526 = vmatpush.msra.mxu0 %v456
    %527 = vmatpush.msra.mxu0 %v455
    %528 = vmatpush.msra.mxu0 %v454
    %529 = vmatpush.msra.mxu0 %v453
    %530 = vmatmul.f32.gmra.mxu0 %v486
    %v531 = vpop.f32.mrf.mxu0
    %v532 = vadd.f32 %v509, %v531
    %533 = vmatmul.f32.gmra.mxu0 %v489
    %v534 = vpop.f32.mrf.mxu0
    %v535 = vadd.f32 %v512, %v534
    %536 = vdwg.mxu0
    %537 = vmatpush.msra.mxu0 %v484
    %538 = vmatpush.msra.mxu0 %v483
    %539 = vmatpush.msra.mxu0 %v482
    %540 = vmatpush.msra.mxu0 %v481
    %541 = vmatpush.msra.mxu0 %v480
    %542 = vmatpush.msra.mxu0 %v479
    %543 = vmatpush.msra.mxu0 %v478
    %544 = vmatpush.msra.mxu0 %v477
    %545 = vmatpush.msra.mxu0 %v476
    %546 = vmatpush.msra.mxu0 %v475
    %547 = vmatpush.msra.mxu0 %v474
    %548 = vmatpush.msra.mxu0 %v473
    %549 = vmatpush.msra.mxu0 %v472
    %550 = vmatpush.msra.mxu0 %v471
    %551 = vmatpush.msra.mxu0 %v470
    %552 = vmatpush.msra.mxu0 %v469
    %553 = vmatmul.f32.gmra.mxu0 %v487
    %v554 = vpop.f32.mrf.mxu0
    %v555 = vadd.f32 %v532, %v554
    %556 = vmatmul.f32.gmra.mxu0 %v490
    %v557 = vpop.f32.mrf.mxu0
    %v558 = vadd.f32 %v535, %v557
    %559 = vdwg.mxu0
    %560 = vst [vmem:[#allocation7] sm:$0xff] %v555
    %561 = vst [vmem:[#allocation7 + $0x8] sm:$0xff] %v558
    // Predicated region
    $region18: #{tpu_custom_call.1} parent=1 // pred_check
      _
    $region19: #{tpu_custom_call.1} parent=1 // pred_check_branch
      %563 = sbr.rel (0) target = $region21
    $region20: #{tpu_custom_call.1} parent=1 // pred_region
      %565 = vsyncadd [#allocation4], 0
      %s566 = sshll.u32 [#allocation7], 4
      %s567 = int_to_ptr.vmem [resolvable:$true] %s566
      %s568 = sshll.u32 %s2, 4
      %s569 = int_to_ptr.hbm [resolvable:$true] %s568
      %574 = dma.vmem_to_hbm [thread:$0]  %s567, 256, %s569, [#allocation4], 128, 128, 8
    $region21: #{tpu_custom_call.1} parent=1 // pred_fallthru
      _
    // Predicated region
    $region22: #{tpu_custom_call.1} parent=1 // pred_check
      _
    $region23: #{tpu_custom_call.1} parent=1 // pred_check_branch
      %576 = sbr.rel (0) target = $region25
    $region24: #{tpu_custom_call.1} parent=1 // pred_region
      %578 = dma.done [#allocation4], 256
    $region25: #{tpu_custom_call.1} parent=1 // pred_fallthru
      _
    %579 = vsyncpa [#allocation3], 1
    %580 = vsyncpa [#allocation4], 1
    %581 = vsyncpa [#allocation5], 1

</llo_original>
